<compile_context>
chip_gen: v7x
topology: tpu7x:2x2x1
jax: 0.10.0
libtpu: 0.0.40
codegen_flags: <defaults>
</compile_context>

<pallas_src>
import jax
import jax.numpy as jnp
from jax.experimental import pallas as pl
from jax.experimental.pallas import tpu as pltpu

_LANE = 128          # lane width of a TPU vreg
_SUBLANE = 8         # f32 sublane count of a TPU vreg
_NEG_SLOPE = 0.01    # PyTorch nn.LeakyReLU default


def _predictor_kernel(x_ref, w_ref, b_ref, o_ref):
    # x_ref: (tr, pack*H)      f32  -- slab tile: `pack` input rows per slab row
    # w_ref: (pack*H, pack*O)  bf16 -- block-diagonal replicated weight (resident)
    # b_ref: (1, pack*O)       f32  -- bias tiled `pack` times (resident)
    # o_ref: (tr, pack*O)      f32  -- lane-dense slab tile of the [M, O] output
    x = x_ref[...].astype(jnp.bfloat16)      # in-kernel cast: free under HBM streaming
    y = jnp.dot(x, w_ref[...], preferred_element_type=jnp.float32)
    y = y + b_ref[...]                       # bias broadcast over slab rows (f32)
    y = jnp.maximum(y, _NEG_SLOPE * y)       # LeakyReLU (slope in (0,1) -> max form)
    o_ref[...] = y.astype(o_ref.dtype)


def predictor_forward(x, weight_t, bias, *, block_rows=32768):
    """x: [M, H] f32, weight_t: [H, O] f32 (transpose of torch weight), bias: [O] f32.

    Output dtype follows x.dtype.  # TODO(synk): expose bf16 output to halve the
    store stream if the consumer tolerates it.
    """
    M, H = x.shape
    Hw, O = weight_t.shape
    assert H == Hw
    out_dtype = x.dtype

    # --- lane-dense output packing -------------------------------------------
    #   x      : [M, H]  ->  x_slab   : [M/pack, pack*H]        (row-major bitcast)
    #   weight : [H, O]  ->  w_block  : [pack*H, pack*O]        (block diagonal)
    #   out    : [M, O]  <-  out_slab : [M/pack, pack*O = 128]  (lane dense)
    if O < _LANE and _LANE % O == 0:
        pack = min(_LANE // O, 16)   # cap: pack >= 32 would flip v5e MXU-bound
    else:
        pack = 1                     # generic fallback (output already lane-wide)
    kdim = pack * H
    ndim = pack * O

    if pack > 1:
        w_big = jax.scipy.linalg.block_diag(*([weight_t] * pack))
        b_big = jnp.tile(bias.reshape(1, O), (1, pack))
    else:
        w_big = weight_t
        b_big = bias.reshape(1, O)
    w_big = w_big.astype(jnp.bfloat16)   # tiny resident weight, native MXU rate
    b_big = b_big.astype(jnp.float32)    # bias stays f32 (added post-MXU)

    # --- row handling: only pad the (<= pack-1)-row tail needed for the slab ---
    pad = (-M) % pack
    x_in = x if pad == 0 else jnp.pad(x, ((0, pad), (0, 0)))
    mp = M + pad
    slab_rows = mp // pack
    x_slab = x_in.reshape(slab_rows, kdim)   # contiguous row-major reshape (free)

    # --- row tiling -------------------------------------------------------------
    tr_target = max(_SUBLANE, (block_rows // pack) // _SUBLANE * _SUBLANE)
    if slab_rows <= tr_target:
        tr = slab_rows                        # single block == full dim (always legal)
    else:
        # keep >= ~4 grid steps so the 'parallel' axis can split across TCs (v7x)
        # and the pipeline has depth; block sublane dim stays a multiple of 8,
        # Pallas masks the non-divisible last block.
        tr = min(tr_target,
                 max(_SUBLANE, (pl.cdiv(slab_rows, 4) // _SUBLANE) * _SUBLANE))
    grid = pl.cdiv(slab_rows, tr)

    out_slab = pl.pallas_call(
        _predictor_kernel,
        out_shape=jax.ShapeDtypeStruct((slab_rows, ndim), out_dtype),
        grid=(grid,),
        in_specs=[
            pl.BlockSpec((tr, kdim), lambda i: (i, 0)),    # x slab row-tile (streamed)
            pl.BlockSpec((kdim, ndim), lambda i: (0, 0)),  # packed weight, resident
            pl.BlockSpec((1, ndim), lambda i: (0, 0)),     # packed bias, resident
        ],
        out_specs=pl.BlockSpec((tr, ndim), lambda i: (i, 0)),
        compiler_params=pltpu.CompilerParams(
            dimension_semantics=("parallel",),             # megacore / v7x 2-TC split
            vmem_limit_bytes=32 << 20,                     # ~12 MiB live; safe on v5e/v6e/v7x
        ),
    )(x_slab, w_big, b_big)

    out = out_slab.reshape(mp, O)
    return out if pad == 0 else out[:M]


def init_predictor_params(key, hidden_size, final_output):
    """Xavier-uniform weight (nn.init.xavier_uniform_) and PyTorch-default Linear bias."""
    kw, kb = jax.random.split(key)
    bound_w = (6.0 / (hidden_size + final_output)) ** 0.5
    w_torch = jax.random.uniform(
        kw, (final_output, hidden_size), jnp.float32, -bound_w, bound_w
    )
    bound_b = 1.0 / (hidden_size ** 0.5)
    b = jax.random.uniform(kb, (final_output,), jnp.float32, -bound_b, bound_b)
    return w_torch.T, b            # stored transposed for x @ W layout


def predictor_reference(x, weight_t, bias):
    y = x @ weight_t + bias[None, :]
    return jnp.where(y > 0, y, _NEG_SLOPE * y)


if __name__ == "__main__":
    hidden_size = 32
    final_output = 16
    batch = 8

    key = jax.random.PRNGKey(0)
    kx, kp = jax.random.split(key)
    x = jax.random.normal(kx, (batch, hidden_size), dtype=jnp.float32)
    weight_t, bias = init_predictor_params(kp, hidden_size, final_output)

    out = jax.block_until_ready(predictor_forward(x, weight_t, bias))
    assert out.shape == (batch, final_output)
    assert out.dtype == x.dtype

    # Tight check vs a reference with the same bf16 rounding of x / weight
    # (f32 accumulation and f32 bias, as in the kernel).
    x_bf = x.astype(jnp.bfloat16).astype(jnp.float32)
    w_bf = weight_t.astype(jnp.bfloat16).astype(jnp.float32)
    ref_bf16 = predictor_reference(x_bf, w_bf, bias)
    assert jnp.allclose(out, ref_bf16, atol=1e-4, rtol=1e-4)

    # Loose check vs the pure-f32 PyTorch-equivalent reference (bf16 inputs ~1e-2 dev).
    ref_f32 = predictor_reference(x, weight_t, bias)
    assert jnp.allclose(out, ref_f32, atol=5e-2, rtol=5e-2)

    # Exercise a non-tile-aligned, non-pack-aligned M to hit the masked last
    # block and the tiny tail-pad path.
    x2 = jax.random.normal(kx, (1037, hidden_size), dtype=jnp.float32)
    out2 = jax.block_until_ready(predictor_forward(x2, weight_t, bias, block_rows=256))
    ref2 = predictor_reference(
        x2.astype(jnp.bfloat16).astype(jnp.float32), w_bf, bias
    )
    assert out2.shape == (1037, final_output)
    assert jnp.allclose(out2, ref2, atol=1e-4, rtol=1e-4)

    print("KERNEL_OK")
</pallas_src>

<mosaic_0001>
module attributes {stable_mosaic.version = 11 : i64} {
  func.func @_predictor_kernel(%arg0: i32, %arg1: memref<1x256xf32, #tpu.memory_space<vmem>>, %arg2: memref<256x128xbf16, #tpu.memory_space<vmem>>, %arg3: memref<1x128xf32, #tpu.memory_space<vmem>>, %arg4: memref<1x128xf32, #tpu.memory_space<vmem>>) attributes {dimension_semantics = [#tpu.dimension_semantics<parallel>], iteration_bounds = array<i64: 1>, scalar_prefetch = 0 : i64, scratch_operands = 0 : i64, tpu.core_type = #tpu.core_type<tc>, window_params = [{transform_indices = @transform_0, window_bounds = array<i64: 1, 256>}, {pipeline_mode = #tpu.pipeline_mode<synchronous>, transform_indices = @transform_1, window_bounds = array<i64: 256, 128>}, {pipeline_mode = #tpu.pipeline_mode<synchronous>, transform_indices = @transform_2, window_bounds = array<i64: 1, 128>}, {transform_indices = @transform_3, window_bounds = array<i64: 1, 128>}]} {
    %c0 = arith.constant 0 : index
    %c0_0 = arith.constant 0 : index
    %0 = vector.load %arg1[%c0, %c0_0] : memref<1x256xf32, #tpu.memory_space<vmem>>, vector<1x256xf32>
    %1 = arith.truncf %0 : vector<1x256xf32> to vector<1x256xbf16>
    %c0_1 = arith.constant 0 : index
    %c0_2 = arith.constant 0 : index
    %2 = vector.load %arg2[%c0_1, %c0_2] : memref<256x128xbf16, #tpu.memory_space<vmem>>, vector<256x128xbf16>
    %cst = arith.constant dense<0.000000e+00> : vector<1x128xf32>
    %3 = tpu.matmul %1, %2, %cst {dimension_numbers = #tpu.dot_dimension_numbers<[1], [0], [0], [1], [0, 0, 1, 1], [], []>} : vector<1x256xbf16>, vector<256x128xbf16>, vector<1x128xf32> -> vector<1x128xf32>
    %c0_3 = arith.constant 0 : index
    %c0_4 = arith.constant 0 : index
    %4 = vector.load %arg3[%c0_3, %c0_4] : memref<1x128xf32, #tpu.memory_space<vmem>>, vector<1x128xf32>
    %5 = arith.addf %3, %4 : vector<1x128xf32>
    %cst_5 = arith.constant 0.00999999977 : f32
    %6 = vector.broadcast %cst_5 : f32 to vector<1x128xf32>
    %7 = arith.mulf %6, %5 : vector<1x128xf32>
    %8 = arith.maximumf %5, %7 : vector<1x128xf32>
    %c0_6 = arith.constant 0 : index
    %c0_7 = arith.constant 0 : index
    %9 = vector.load %arg4[%c0_6, %c0_7] : memref<1x128xf32, #tpu.memory_space<vmem>>, vector<1x128xf32>
    tpu.vector_store %arg4[%c0_6, %c0_7], %8 {strides = array<i32>} : memref<1x128xf32, #tpu.memory_space<vmem>>, vector<1x128xf32>,
    return
  }
  func.func @transform_0(%arg0: i32) -> (i32, i32) {
    %c0_i32 = arith.constant 0 : i32
    %c0_i32_0 = arith.constant 0 : i32
    return %arg0, %c0_i32 : i32, i32
  }
  func.func @transform_1(%arg0: i32) -> (i32, i32) {
    %c0_i32 = arith.constant 0 : i32
    %c0_i32_0 = arith.constant 0 : i32
    %c0_i32_1 = arith.constant 0 : i32
    return %c0_i32, %c0_i32_0 : i32, i32
  }
  func.func @transform_2(%arg0: i32) -> (i32, i32) {
    %c0_i32 = arith.constant 0 : i32
    %c0_i32_0 = arith.constant 0 : i32
    %c0_i32_1 = arith.constant 0 : i32
    return %c0_i32, %c0_i32_0 : i32, i32
  }
  func.func @transform_3(%arg0: i32) -> (i32, i32) {
    %c0_i32 = arith.constant 0 : i32
    %c0_i32_0 = arith.constant 0 : i32
    return %arg0, %c0_i32 : i32, i32
  }
}

</mosaic_0001>

<llo_original>
// kernel: tpu_custom_call.1
$region0: #{tpu_custom_call.1}
  #allocation0 [shape = 'u32[]', space=smem, size = 0x4, offset = 0x4, fixed_abs, tag = 'smem constant byte address 0x4 - core index']
  #allocation1 [shape = 'u32[144,128]{1,0:T(1,128)}', space=vmem, size = 0x12000, scoped, tag = 'internal scratch']
  %s0 = inlined_call_operand.hbm [shape: f32[1,256], index: 0, kind: input, shape index: {}]
  %s1 = inlined_call_operand.hbm [shape: bf16[256,128], index: 1, kind: input, shape index: {}]
  %s2 = inlined_call_operand.vmem [shape: f32[1,128], index: 2, kind: input, shape index: {}]
  %s3 = inlined_call_operand.hbm [shape: f32[1,128], index: 3, kind: output, shape index: {}]
  %s4 = sld [smem:[#allocation0]]
  $region30: #{tpu_custom_call.1} parent=0
    _
  %s6 = ssub.s32 1, %s4
  %s7 = scalar_select 0, %s6, %s4
  $region1: #{tpu_custom_call.1} parent=0
    #allocation2 [shape = 'u8[1024]{0}', space=vmem, size = 0x400, scoped, tag = 'input window, operand 0, single buffered']
    #allocation3 [shape = 's32[1]{0}', space=sflag, size = 0x4, scoped, tag = 'scoped memory for tpu_custom_call.1']
    #allocation4 [shape = 's32[1]{0}', space=sflag, size = 0x4, scoped, tag = 'scoped memory for tpu_custom_call.1']
    #allocation5 [shape = 'u8[65536]{0}', space=vmem, size = 0x10000, scoped, tag = 'input window, operand 1, single buffered']
    #allocation6 [shape = 's32[1]{0}', space=sflag, size = 0x4, scoped, tag = 'scoped memory for tpu_custom_call.1']
    #allocation7 [shape = 'u8[512]{0}', space=vmem, size = 0x400, scoped, tag = 'output window, operand 0, single buffered']
    %8 = vsyncpa [#allocation3], 0
    %9 = vsyncpa [#allocation6], 0
    %10 = vsyncpa [#allocation4], 0
    // Predicated region
    $region2: #{tpu_custom_call.1} parent=1 // pred_check
      _
    $region3: #{tpu_custom_call.1} parent=1 // pred_check_branch
      %12 = sbr.rel (0) target = $region5
    $region4: #{tpu_custom_call.1} parent=1 // pred_region
      %s14 = ssub.s32 32, 32
      %15 = vsyncadd [#allocation3], %s14
      %s17 = sshll.u32 [#allocation2], 4
      %s18 = int_to_ptr.vmem [resolvable:$true] %s17
      %20 = dma.hbm_to_vmem [thread:$0]  %s0, 32, %s18, [#allocation3]
    $region5: #{tpu_custom_call.1} parent=1 // pred_fallthru
      _
    // Predicated region
    $region6: #{tpu_custom_call.1} parent=1 // pred_check
      _
    $region7: #{tpu_custom_call.1} parent=1 // pred_check_branch
      %22 = sbr.rel (0) target = $region9
    $region8: #{tpu_custom_call.1} parent=1 // pred_region
      %s24 = ssub.s32 2048, 2048
      %25 = vsyncadd [#allocation6], %s24
      %s26 = sshll.u32 [#allocation5], 4
      %s27 = int_to_ptr.vmem [resolvable:$true] %s26
      %32 = dma.hbm_to_vmem [thread:$0]  %s1, 2048, %s27, [#allocation6], 64, 64, 4
    $region9: #{tpu_custom_call.1} parent=1 // pred_fallthru
      _
    // Predicated region
    $region10: #{tpu_custom_call.1} parent=1 // pred_check
      _
    $region11: #{tpu_custom_call.1} parent=1 // pred_check_branch
      %34 = sbr.rel (0) target = $region13
    $region12: #{tpu_custom_call.1} parent=1 // pred_region
      _
    $region13: #{tpu_custom_call.1} parent=1 // pred_fallthru
      _
    // Predicated region
    $region14: #{tpu_custom_call.1} parent=1 // pred_check
      _
    $region15: #{tpu_custom_call.1} parent=1 // pred_check_branch
      %36 = sbr.rel (0) target = $region17
    $region16: #{tpu_custom_call.1} parent=1 // pred_region
      %37 = dma.done [#allocation3], 32
    $region17: #{tpu_custom_call.1} parent=1 // pred_fallthru
      _
    // Predicated region
    $region18: #{tpu_custom_call.1} parent=1 // pred_check
      _
    $region19: #{tpu_custom_call.1} parent=1 // pred_check_branch
      %39 = sbr.rel (0) target = $region21
    $region20: #{tpu_custom_call.1} parent=1 // pred_region
      %40 = dma.done [#allocation6], 2048
    $region21: #{tpu_custom_call.1} parent=1 // pred_fallthru
      _
    %v42 = vld [vmem:[#allocation2] sm:$0x3]
    %v44 = vlaneseq
    %v45 = vshrl.u32 %v44, 7
    %v46 = vsub.s32 0, %v45
    %v47 = vrot.slane %v42, %v46
    %v48 = vlaneseq
    %v49 = vshrl.u32 %v48, 7
    %v50 = vsub.s32 1, %v49
    %v51 = vrot.slane %v42, %v50
    %v54 = vpack.c.bf16 %v47, %v47
    %v55 = vpack.c.bf16 %v51, %v51
    %v56 = vld [vmem:[#allocation5] sm:$0xf]
    %v57 = vld [vmem:[#allocation5 + $0x4] sm:$0xf]
    %v58 = vld [vmem:[#allocation5 + $0x8] sm:$0xf]
    %v59 = vld [vmem:[#allocation5 + $0xc] sm:$0xf]
    %v60 = vld [vmem:[#allocation5 + $0x10] sm:$0xf]
    %v61 = vld [vmem:[#allocation5 + $0x14] sm:$0xf]
    %v62 = vld [vmem:[#allocation5 + $0x18] sm:$0xf]
    %v63 = vld [vmem:[#allocation5 + $0x1c] sm:$0xf]
    %v64 = vld [vmem:[#allocation5 + $0x20] sm:$0xf]
    %v65 = vld [vmem:[#allocation5 + $0x24] sm:$0xf]
    %v66 = vld [vmem:[#allocation5 + $0x28] sm:$0xf]
    %v67 = vld [vmem:[#allocation5 + $0x2c] sm:$0xf]
    %v68 = vld [vmem:[#allocation5 + $0x30] sm:$0xf]
    %v69 = vld [vmem:[#allocation5 + $0x34] sm:$0xf]
    %v70 = vld [vmem:[#allocation5 + $0x38] sm:$0xf]
    %v71 = vld [vmem:[#allocation5 + $0x3c] sm:$0xf]
    %v72 = vld [vmem:[#allocation5 + $0x40] sm:$0xf]
    %v73 = vld [vmem:[#allocation5 + $0x44] sm:$0xf]
    %v74 = vld [vmem:[#allocation5 + $0x48] sm:$0xf]
    %v75 = vld [vmem:[#allocation5 + $0x4c] sm:$0xf]
    %v76 = vld [vmem:[#allocation5 + $0x50] sm:$0xf]
    %v77 = vld [vmem:[#allocation5 + $0x54] sm:$0xf]
    %v78 = vld [vmem:[#allocation5 + $0x58] sm:$0xf]
    %v79 = vld [vmem:[#allocation5 + $0x5c] sm:$0xf]
    %v80 = vld [vmem:[#allocation5 + $0x60] sm:$0xf]
    %v81 = vld [vmem:[#allocation5 + $0x64] sm:$0xf]
    %v82 = vld [vmem:[#allocation5 + $0x68] sm:$0xf]
    %v83 = vld [vmem:[#allocation5 + $0x6c] sm:$0xf]
    %v84 = vld [vmem:[#allocation5 + $0x70] sm:$0xf]
    %v85 = vld [vmem:[#allocation5 + $0x74] sm:$0xf]
    %v86 = vld [vmem:[#allocation5 + $0x78] sm:$0xf]
    %v87 = vld [vmem:[#allocation5 + $0x7c] sm:$0xf]
    %v88 = vld [vmem:[%s2] sm:$0x1]
    %v121 = vunpack.c.l.b16 %v56
    %v122 = vunpack.c.l.b16 %v57
    %v123 = vunpack.c.l.b16 %v58
    %v124 = vunpack.c.l.b16 %v59
    %v125 = vunpack.c.l.b16 %v60
    %v126 = vunpack.c.l.b16 %v61
    %v127 = vunpack.c.l.b16 %v62
    %v128 = vunpack.c.l.b16 %v63
    %v129 = vunpack.c.l.b16 %v64
    %v130 = vunpack.c.l.b16 %v65
    %v131 = vunpack.c.l.b16 %v66
    %v132 = vunpack.c.l.b16 %v67
    %v133 = vunpack.c.l.b16 %v68
    %v134 = vunpack.c.l.b16 %v69
    %v135 = vunpack.c.l.b16 %v70
    %v136 = vunpack.c.l.b16 %v71
    %v137 = vunpack.c.l.b16 %v72
    %v138 = vunpack.c.l.b16 %v73
    %v139 = vunpack.c.l.b16 %v74
    %v140 = vunpack.c.l.b16 %v75
    %v141 = vunpack.c.l.b16 %v76
    %v142 = vunpack.c.l.b16 %v77
    %v143 = vunpack.c.l.b16 %v78
    %v144 = vunpack.c.l.b16 %v79
    %v145 = vunpack.c.l.b16 %v80
    %v146 = vunpack.c.l.b16 %v81
    %v147 = vunpack.c.l.b16 %v82
    %v148 = vunpack.c.l.b16 %v83
    %v149 = vunpack.c.l.b16 %v84
    %v150 = vunpack.c.l.b16 %v85
    %v151 = vunpack.c.l.b16 %v86
    %v152 = vunpack.c.l.b16 %v87
    %v153 = vpack.c.b16 %v122, %v121
    %v154 = vpack.c.b16 %v124, %v123
    %v155 = vpack.c.b16 %v126, %v125
    %v156 = vpack.c.b16 %v128, %v127
    %v157 = vpack.c.b16 %v130, %v129
    %v158 = vpack.c.b16 %v132, %v131
    %v159 = vpack.c.b16 %v134, %v133
    %v160 = vpack.c.b16 %v136, %v135
    %v161 = vpack.c.b16 %v138, %v137
    %v162 = vpack.c.b16 %v140, %v139
    %v163 = vpack.c.b16 %v142, %v141
    %v164 = vpack.c.b16 %v144, %v143
    %v165 = vpack.c.b16 %v146, %v145
    %v166 = vpack.c.b16 %v148, %v147
    %v167 = vpack.c.b16 %v150, %v149
    %v168 = vpack.c.b16 %v152, %v151
    %185 = vmatprep.subr.bf16.mxu0 0
    %186 = vmatpush1.bf16.msra.mxu0 %v153
    %187 = vmatprep.subr.bf16.mxu0 0
    %188 = vmatpush1.bf16.msra.mxu0 %v154
    %189 = vmatprep.subr.bf16.mxu0 0
    %190 = vmatpush1.bf16.msra.mxu0 %v155
    %191 = vmatprep.subr.bf16.mxu0 0
    %192 = vmatpush1.bf16.msra.mxu0 %v156
    %193 = vmatprep.subr.bf16.mxu0 0
    %194 = vmatpush1.bf16.msra.mxu0 %v157
    %195 = vmatprep.subr.bf16.mxu0 0
    %196 = vmatpush1.bf16.msra.mxu0 %v158
    %197 = vmatprep.subr.bf16.mxu0 0
    %198 = vmatpush1.bf16.msra.mxu0 %v159
    %199 = vmatprep.subr.bf16.mxu0 0
    %200 = vmatpush1.bf16.msra.mxu0 %v160
    %201 = vmatprep.subr.bf16.mxu0 0
    %202 = vmatpush1.bf16.msra.mxu0 %v161
    %203 = vmatprep.subr.bf16.mxu0 0
    %204 = vmatpush1.bf16.msra.mxu0 %v162
    %205 = vmatprep.subr.bf16.mxu0 0
    %206 = vmatpush1.bf16.msra.mxu0 %v163
    %207 = vmatprep.subr.bf16.mxu0 0
    %208 = vmatpush1.bf16.msra.mxu0 %v164
    %209 = vmatprep.subr.bf16.mxu0 0
    %210 = vmatpush1.bf16.msra.mxu0 %v165
    %211 = vmatprep.subr.bf16.mxu0 0
    %212 = vmatpush1.bf16.msra.mxu0 %v166
    %213 = vmatprep.subr.bf16.mxu0 0
    %214 = vmatpush1.bf16.msra.mxu0 %v167
    %215 = vmatprep.subr.bf16.mxu0 0
    %216 = vmatpush1.bf16.msra.mxu0 %v168
    %217 = vmatprep.mubr.bf16.mxu0 %v55
    %218 = vmatmul.mubr.bf16.gmra.mrb[0].mxu0 %v54
    %v219 = vpop.f32.mrb[0].mxu0
    %v220 = vadd.f32 %v88, %v219
    %v221 = vpop.f32.mrb[0].mxu0
    %v222 = vpop.f32.mrb[0].mxu0
    %v223 = vpop.f32.mrb[0].mxu0
    %224 = vdwg.mxu0
    %v225 = vmul.f32 %v220, 0.01
    %v226 = vmax.f32 %v220, %v225
    %227 = vst [vmem:[#allocation7] sm:$0x1] %v226
    // Predicated region
    $region22: #{tpu_custom_call.1} parent=1 // pred_check
      _
    $region23: #{tpu_custom_call.1} parent=1 // pred_check_branch
      %229 = sbr.rel (0) target = $region25
    $region24: #{tpu_custom_call.1} parent=1 // pred_region
      %s231 = ssub.s32 16, 16
      %232 = vsyncadd [#allocation4], %s231
      %s234 = sshll.u32 [#allocation7], 4
      %s235 = int_to_ptr.vmem [resolvable:$true] %s234
      %237 = dma.vmem_to_hbm [thread:$0]  %s235, 16, %s3, [#allocation4]
    $region25: #{tpu_custom_call.1} parent=1 // pred_fallthru
      _
    // Predicated region
    $region26: #{tpu_custom_call.1} parent=1 // pred_check
      _
    $region27: #{tpu_custom_call.1} parent=1 // pred_check_branch
      %239 = sbr.rel (0) target = $region29
    $region28: #{tpu_custom_call.1} parent=1 // pred_region
      %240 = dma.done [#allocation4], 16
    $region29: #{tpu_custom_call.1} parent=1 // pred_fallthru
      _
    %241 = vsyncpa [#allocation3], 1
    %242 = vsyncpa [#allocation6], 1
    %243 = vsyncpa [#allocation4], 1

</llo_original>
